<compile_context>
chip_gen: v6e
topology: v6e:2x2x1
jax: 0.10.0
libtpu: 0.0.40
codegen_flags: <defaults>
</compile_context>

<pallas_src>
import jax
import jax.numpy as jnp
from jax import lax
from jax.experimental import pallas as pl
from jax.experimental.pallas import tpu as pltpu


_CHUNK = 512            # in-kernel compute sub-chunk (rows); multiple of 8 & 128
_MAX_BATCH_TILE = 8192  # VMEM-safe cap (~17 MiB with lane padding) on all gens


def _round_up(x, m):
    return ((x + m - 1) // m) * m


def _choose_batch_tile(b, max_tile):
    """Rows per grid step.

    - b <= _CHUNK: one step whose block equals the full array (no (8,128)
      constraint applies).
    - otherwise: an *even* number of roughly equal steps, so under
      dimension_semantics=('parallel',) v7x's two TensorCores get balanced
      work, with each step <= max_tile rows and a multiple of 8 (sublane rule).
    """
    if b <= _CHUNK:
        return b
    nsteps = max(2, 2 * pl.cdiv(b, 2 * max_tile))
    return min(max_tile, _round_up(pl.cdiv(b, nsteps), 8))


def m3critic_forward(state, action, params, *, batch_tile=4096):
    B, state_dim = state.shape
    _, im_dim = action.shape
    w0, b0, w1a, w1b, b1, w2, b2 = params
    h1 = w0.shape[1]
    h2 = w1a.shape[1]
    hmax = max(h1, h2)

    tb = _choose_batch_tile(B, min(batch_tile, _MAX_BATCH_TILE))
    num_tiles = pl.cdiv(B, tb)
    n_full = tb // _CHUNK          # full 512-row chunks per tile
    tail = tb - n_full * _CHUNK    # static tail chunk (multiple of 8, or == B)

    # bf16 matmul operands (halves MXU push count); biases / w2-row stay f32
    # until used.  In a training loop cache these casts + the aux pack.
    w0b = w0.astype(jnp.bfloat16)
    w1ab = w1a.astype(jnp.bfloat16)
    w1bb = w1b.astype(jnp.bfloat16)
    aux = jnp.zeros((3, hmax), jnp.float32)
    aux = aux.at[0, :h1].set(b0[0])      # row 0: b0
    aux = aux.at[1, :h2].set(b1[0])      # row 1: b1
    aux = aux.at[2, :h2].set(w2[0])      # row 2: output weight row

    def kernel(s_ref, a_ref, w0_ref, w1a_ref, w1b_ref, aux_ref, b2_ref, o_ref):
        # Resident (constant index_map) operands: loaded once per grid step.
        w0v = w0_ref[...]
        w1av = w1a_ref[...]
        w1bv = w1b_ref[...]
        auxv = aux_ref[...]
        b0v = auxv[0:1, :h1]
        b1v = auxv[1:2, :h2]
        w2v = auxv[2:3, :h2].astype(jnp.bfloat16)
        b2v = b2_ref[0]

        def compute(start, n):
            # f32 streamed in, cast to bf16 on the VPU (huge slack here).
            s = s_ref[pl.ds(start, n), :].astype(jnp.bfloat16)
            a = a_ref[pl.ds(start, n), :].astype(jnp.bfloat16)
            # hidden0: relu(s @ W0 + b0), f32 accumulate / bias / ReLU.
            t0 = jnp.dot(s, w0v, preferred_element_type=jnp.float32)
            t0 = jnp.maximum(t0 + b0v, 0.0)
            # hidden1 on concat([h0, action]) == h0 @ W1a + action @ W1b.
            t1 = jnp.dot(t0.astype(jnp.bfloat16), w1av,
                         preferred_element_type=jnp.float32)
            t1 = t1 + jnp.dot(a, w1bv, preferred_element_type=jnp.float32)
            t1 = jnp.maximum(t1 + b1v, 0.0)
            # output layer (h2 -> 1) as w2 @ t1^T: lane-dense (1, n) row.
            v = jnp.einsum('oh,nh->on', w2v, t1.astype(jnp.bfloat16),
                           preferred_element_type=jnp.float32)
            o_ref[0, :, pl.ds(start, n)] = v + b2v

        if n_full > 0:
            def body(c, carry):
                compute(pl.multiple_of(c * _CHUNK, _CHUNK), _CHUNK)
                return carry
            lax.fori_loop(0, n_full, body, None, unroll=True)
        if tail > 0:
            compute(n_full * _CHUNK, tail)   # static start/size

    def batch_map(i):
        return (i, 0)

    def whole(i):
        return (0, 0)

    out = pl.pallas_call(
        kernel,
        out_shape=jax.ShapeDtypeStruct((num_tiles, 1, tb), jnp.float32),
        grid_spec=pltpu.PrefetchScalarGridSpec(
            num_scalar_prefetch=0,
            grid=(num_tiles,),
            in_specs=[
                pl.BlockSpec((tb, state_dim), batch_map),   # state  (f32 stream)
                pl.BlockSpec((tb, im_dim), batch_map),      # action (f32 stream)
                pl.BlockSpec((state_dim, h1), whole),       # W0  bf16 [in, out]
                pl.BlockSpec((h1, h2), whole),              # W1a bf16 (h0 path)
                pl.BlockSpec((im_dim, h2), whole),          # W1b bf16 (action path)
                pl.BlockSpec((3, hmax), whole),             # packed b0 / b1 / w2
                pl.BlockSpec(memory_space=pltpu.MemorySpace.SMEM),  # b2 scalar
            ],
            out_specs=pl.BlockSpec((1, 1, tb), lambda i: (i, 0, 0)),
        ),
        compiler_params=pltpu.CompilerParams(
            dimension_semantics=("parallel",)),
    )(state, action, w0b, w1ab, w1bb, aux, b2)

    # Lane-dense kernel output -> module's (B, 1); garbage lanes from the
    # (masked-semantics) ragged last input tile are sliced away here.
    return out.reshape(-1)[:B].reshape(B, 1)


def init_params(key, state_dim, im_dim, h1, h2):
    """Deterministic init mirroring M3Critic.init():
    - hidden0 / hidden1 weights: xavier_uniform
    - output weight: uniform(-0.3, 0.3)
    - biases: PyTorch Linear default uniform(-1/sqrt(fan_in), 1/sqrt(fan_in))
    Weights stored as [in, out]; output weight as a (1, h2) row; b2 as (1,)."""
    ks = jax.random.split(key, 7)

    def xavier(k, fan_in, fan_out):
        bound = (6.0 / (fan_in + fan_out)) ** 0.5
        return jax.random.uniform(k, (fan_in, fan_out), jnp.float32,
                                  -bound, bound)

    def bias(k, fan_in, fan_out):
        bound = 1.0 / (fan_in ** 0.5)
        return jax.random.uniform(k, (1, fan_out), jnp.float32, -bound, bound)

    w0 = xavier(ks[0], state_dim, h1)
    b0 = bias(ks[1], state_dim, h1)
    w1_full = xavier(ks[2], h1 + im_dim, h2)      # cat([h0, action]) weight
    w1a, w1b = w1_full[:h1, :], w1_full[h1:, :]   # split for concat-free matmul
    b1 = bias(ks[3], h1 + im_dim, h2)
    w2 = jax.random.uniform(ks[4], (1, h2), jnp.float32, -0.3, 0.3)
    b2 = bias(ks[5], h2, 1).reshape((1,))
    return (w0, b0, w1a, w1b, b1, w2, b2)


def reference_forward(state, action, params):
    """Pure-JAX reference mirroring the kernel numerics exactly
    (bf16 matmul operands, f32 accumulation / element-wise math)."""
    w0, b0, w1a, w1b, b1, w2, b2 = params
    s = state.astype(jnp.bfloat16)
    a = action.astype(jnp.bfloat16)
    h0 = jnp.dot(s, w0.astype(jnp.bfloat16),
                 preferred_element_type=jnp.float32)
    h0 = jnp.maximum(h0 + b0, 0.0)
    t1 = jnp.dot(h0.astype(jnp.bfloat16), w1a.astype(jnp.bfloat16),
                 preferred_element_type=jnp.float32)
    t1 = t1 + jnp.dot(a, w1b.astype(jnp.bfloat16),
                      preferred_element_type=jnp.float32)
    t1 = jnp.maximum(t1 + b1, 0.0)
    v = jnp.einsum('nh,oh->no', t1.astype(jnp.bfloat16),
                   w2.astype(jnp.bfloat16),
                   preferred_element_type=jnp.float32)
    return v + b2[0]


def reference_forward_f32(state, action, params):
    """Full-f32 reference matching the original PyTorch module."""
    w0, b0, w1a, w1b, b1, w2, b2 = params
    h0 = jax.nn.relu(state @ w0 + b0)
    x = jnp.concatenate([h0, action], axis=-1)
    w1 = jnp.concatenate([w1a, w1b], axis=0)
    hh = jax.nn.relu(x @ w1 + b1)
    return hh @ w2.T + b2[0]


if __name__ == "__main__":
    # Small shapes consistent with the module: state_dim=16, im_dim (action)=8,
    # m3critic_h1=32, m3critic_h2=32, batch=8.
    B, state_dim, im_dim, h1, h2 = 8, 16, 8, 32, 32

    key = jax.random.PRNGKey(0)
    k_state, k_action, k_params = jax.random.split(key, 3)

    state = jax.random.normal(k_state, (B, state_dim), jnp.float32)
    action = jax.random.normal(k_action, (B, im_dim), jnp.float32)
    params = init_params(k_params, state_dim, im_dim, h1, h2)

    value = jax.block_until_ready(m3critic_forward(state, action, params))
    ref = reference_forward(state, action, params)
    ref32 = reference_forward_f32(state, action, params)
    assert value.shape == (B, 1)
    assert jnp.allclose(value, ref, atol=1e-3, rtol=1e-3)
    assert jnp.allclose(value, ref32, atol=1e-1, rtol=5e-2)  # bf16 vs f32 path

    # Larger / ragged batches: balanced 2-step grids, fori chunk loop + static
    # tail chunk, lane-dense (1, tb) output blocks, wrapper slice of pad lanes.
    for B2 in (1100, 3000):
        kb1, kb2 = jax.random.split(jax.random.PRNGKey(B2))
        state2 = jax.random.normal(kb1, (B2, state_dim), jnp.float32)
        action2 = jax.random.normal(kb2, (B2, im_dim), jnp.float32)
        value2 = jax.block_until_ready(m3critic_forward(state2, action2, params))
        ref2 = reference_forward(state2, action2, params)
        assert value2.shape == (B2, 1)
        assert jnp.allclose(value2, ref2, atol=1e-3, rtol=1e-3)

    print("KERNEL_OK")
</pallas_src>

<mosaic_0001>
module attributes {stable_mosaic.version = 11 : i64} {
  func.func @kernel(%arg0: i32, %arg1: memref<8x16xf32, #tpu.memory_space<vmem>>, %arg2: memref<8x8xf32, #tpu.memory_space<vmem>>, %arg3: memref<16x32xbf16, #tpu.memory_space<vmem>>, %arg4: memref<32x32xbf16, #tpu.memory_space<vmem>>, %arg5: memref<8x32xbf16, #tpu.memory_space<vmem>>, %arg6: memref<3x32xf32, #tpu.memory_space<vmem>>, %arg7: memref<1xf32, #tpu.memory_space<smem>>, %arg8: memref<1x1x8xf32, #tpu.memory_space<vmem>>) attributes {dimension_semantics = [#tpu.dimension_semantics<parallel>], iteration_bounds = array<i64: 1>, scalar_prefetch = 0 : i64, scratch_operands = 0 : i64, tpu.core_type = #tpu.core_type<tc>, window_params = [{transform_indices = @transform_0, window_bounds = array<i64: 8, 16>}, {transform_indices = @transform_1, window_bounds = array<i64: 8, 8>}, {pipeline_mode = #tpu.pipeline_mode<synchronous>, transform_indices = @transform_2, window_bounds = array<i64: 16, 32>}, {pipeline_mode = #tpu.pipeline_mode<synchronous>, transform_indices = @transform_3, window_bounds = array<i64: 32, 32>}, {pipeline_mode = #tpu.pipeline_mode<synchronous>, transform_indices = @transform_4, window_bounds = array<i64: 8, 32>}, {pipeline_mode = #tpu.pipeline_mode<synchronous>, transform_indices = @transform_5, window_bounds = array<i64: 3, 32>}, {transform_indices = @transform_6, window_bounds = array<i64: 1>}, {transform_indices = @transform_7, window_bounds = array<i64: 1, 1, 8>}]} {
    %c0 = arith.constant 0 : index
    %c0_0 = arith.constant 0 : index
    %0 = vector.load %arg3[%c0, %c0_0] : memref<16x32xbf16, #tpu.memory_space<vmem>>, vector<16x32xbf16>
    %c0_1 = arith.constant 0 : index
    %c0_2 = arith.constant 0 : index
    %1 = vector.load %arg4[%c0_1, %c0_2] : memref<32x32xbf16, #tpu.memory_space<vmem>>, vector<32x32xbf16>
    %c0_3 = arith.constant 0 : index
    %c0_4 = arith.constant 0 : index
    %2 = vector.load %arg5[%c0_3, %c0_4] : memref<8x32xbf16, #tpu.memory_space<vmem>>, vector<8x32xbf16>
    %c0_5 = arith.constant 0 : index
    %c0_6 = arith.constant 0 : index
    %3 = vector.load %arg6[%c0_5, %c0_6] : memref<3x32xf32, #tpu.memory_space<vmem>>, vector<3x32xf32>
    %4 = vector.extract_strided_slice %3 {offsets = [0, 0], sizes = [1, 32], strides = [1, 1]} : vector<3x32xf32> to vector<1x32xf32>
    %5 = vector.extract_strided_slice %3 {offsets = [1, 0], sizes = [1, 32], strides = [1, 1]} : vector<3x32xf32> to vector<1x32xf32>
    %6 = vector.extract_strided_slice %3 {offsets = [2, 0], sizes = [1, 32], strides = [1, 1]} : vector<3x32xf32> to vector<1x32xf32>
    %7 = arith.truncf %6 : vector<1x32xf32> to vector<1x32xbf16>
    %c0_7 = arith.constant 0 : index
    %8 = memref.load %arg7[%c0_7] : memref<1xf32, #tpu.memory_space<smem>>
    %c0_8 = arith.constant 0 : index
    %c0_9 = arith.constant 0 : index
    %9 = vector.load %arg1[%c0_8, %c0_9] : memref<8x16xf32, #tpu.memory_space<vmem>>, vector<8x16xf32>
    %10 = arith.truncf %9 : vector<8x16xf32> to vector<8x16xbf16>
    %c0_10 = arith.constant 0 : index
    %c0_11 = arith.constant 0 : index
    %11 = vector.load %arg2[%c0_10, %c0_11] : memref<8x8xf32, #tpu.memory_space<vmem>>, vector<8x8xf32>
    %12 = arith.truncf %11 : vector<8x8xf32> to vector<8x8xbf16>
    %cst = arith.constant dense<0.000000e+00> : vector<8x32xf32>
    %13 = tpu.matmul %10, %0, %cst {dimension_numbers = #tpu.dot_dimension_numbers<[1], [0], [0], [1], [0, 0, 1, 1], [], []>} : vector<8x16xbf16>, vector<16x32xbf16>, vector<8x32xf32> -> vector<8x32xf32>
    %14 = vector.broadcast %4 : vector<1x32xf32> to vector<8x32xf32>
    %15 = arith.addf %13, %14 : vector<8x32xf32>
    %cst_12 = arith.constant 0.000000e+00 : f32
    %16 = vector.broadcast %cst_12 : f32 to vector<8x32xf32>
    %17 = arith.maximumf %15, %16 : vector<8x32xf32>
    %18 = arith.truncf %17 : vector<8x32xf32> to vector<8x32xbf16>
    %cst_13 = arith.constant dense<0.000000e+00> : vector<8x32xf32>
    %19 = tpu.matmul %18, %1, %cst_13 {dimension_numbers = #tpu.dot_dimension_numbers<[1], [0], [0], [1], [0, 0, 1, 1], [], []>} : vector<8x32xbf16>, vector<32x32xbf16>, vector<8x32xf32> -> vector<8x32xf32>
    %cst_14 = arith.constant dense<0.000000e+00> : vector<8x32xf32>
    %20 = tpu.matmul %12, %2, %cst_14 {dimension_numbers = #tpu.dot_dimension_numbers<[1], [0], [0], [1], [0, 0, 1, 1], [], []>} : vector<8x8xbf16>, vector<8x32xbf16>, vector<8x32xf32> -> vector<8x32xf32>
    %21 = arith.addf %19, %20 : vector<8x32xf32>
    %22 = vector.broadcast %5 : vector<1x32xf32> to vector<8x32xf32>
    %23 = arith.addf %21, %22 : vector<8x32xf32>
    %cst_15 = arith.constant 0.000000e+00 : f32
    %24 = vector.broadcast %cst_15 : f32 to vector<8x32xf32>
    %25 = arith.maximumf %23, %24 : vector<8x32xf32>
    %26 = arith.truncf %25 : vector<8x32xf32> to vector<8x32xbf16>
    "tpu.trace_start"() <{level = 10 : i32, message = "oh,nh->on"}> : () -> ()
    %cst_16 = arith.constant dense<0.000000e+00> : vector<1x8xf32>
    %27 = tpu.matmul %7, %26, %cst_16 {dimension_numbers = #tpu.dot_dimension_numbers<[1], [1], [0], [0], [0, 0, 1, 0], [], []>} : vector<1x32xbf16>, vector<8x32xbf16>, vector<1x8xf32> -> vector<1x8xf32>
    "tpu.trace_stop"() : () -> ()
    %28 = vector.broadcast %8 : f32 to vector<1x8xf32>
    %29 = arith.addf %27, %28 : vector<1x8xf32>
    %c0_17 = arith.constant 0 : index
    %c0_18 = arith.constant 0 : index
    %c0_19 = arith.constant 0 : index
    %30 = vector.load %arg8[%c0_17, %c0_18, %c0_19] : memref<1x1x8xf32, #tpu.memory_space<vmem>>, vector<1x1x8xf32>
    %31 = vector.shape_cast %30 : vector<1x1x8xf32> to vector<1x8xf32>
    %32 = vector.shape_cast %29 : vector<1x8xf32> to vector<1x1x8xf32>
    tpu.vector_store %arg8[%c0_17, %c0_18, %c0_19], %32 {strides = array<i32>} : memref<1x1x8xf32, #tpu.memory_space<vmem>>, vector<1x1x8xf32>,
    return
  }
  func.func @transform_0(%arg0: i32) -> (i32, i32) {
    %c0_i32 = arith.constant 0 : i32
    %c0_i32_0 = arith.constant 0 : i32
    return %arg0, %c0_i32 : i32, i32
  }
  func.func @transform_1(%arg0: i32) -> (i32, i32) {
    %c0_i32 = arith.constant 0 : i32
    %c0_i32_0 = arith.constant 0 : i32
    return %arg0, %c0_i32 : i32, i32
  }
  func.func @transform_2(%arg0: i32) -> (i32, i32) {
    %c0_i32 = arith.constant 0 : i32
    %c0_i32_0 = arith.constant 0 : i32
    %c0_i32_1 = arith.constant 0 : i32
    return %c0_i32, %c0_i32_0 : i32, i32
  }
  func.func @transform_3(%arg0: i32) -> (i32, i32) {
    %c0_i32 = arith.constant 0 : i32
    %c0_i32_0 = arith.constant 0 : i32
    %c0_i32_1 = arith.constant 0 : i32
    return %c0_i32, %c0_i32_0 : i32, i32
  }
  func.func @transform_4(%arg0: i32) -> (i32, i32) {
    %c0_i32 = arith.constant 0 : i32
    %c0_i32_0 = arith.constant 0 : i32
    %c0_i32_1 = arith.constant 0 : i32
    return %c0_i32, %c0_i32_0 : i32, i32
  }
  func.func @transform_5(%arg0: i32) -> (i32, i32) {
    %c0_i32 = arith.constant 0 : i32
    %c0_i32_0 = arith.constant 0 : i32
    %c0_i32_1 = arith.constant 0 : i32
    return %c0_i32, %c0_i32_0 : i32, i32
  }
  func.func @transform_6(%arg0: i32) -> i32 {
    %c0_i32 = arith.constant 0 : i32
    %c0_i32_0 = arith.constant 0 : i32
    return %c0_i32 : i32
  }
  func.func @transform_7(%arg0: i32) -> (i32, i32, i32) {
    %c0_i32 = arith.constant 0 : i32
    %c0_i32_0 = arith.constant 0 : i32
    %c0_i32_1 = arith.constant 0 : i32
    return %arg0, %c0_i32, %c0_i32_0 : i32, i32, i32
  }
}

</mosaic_0001>

<llo_original>
// kernel: tpu_custom_call.1
$region0: #{tpu_custom_call.1}
  #allocation0 [shape = 'u32[]', space=smem, size = 0x4, offset = 0x4, fixed_abs, tag = 'smem constant byte address 0x4 - core index']
  #allocation1 [shape = 'u32[144,128]{1,0:T(1,128)}', space=vmem, size = 0x12000, scoped, tag = 'internal scratch']
  #allocation2 [shape = 'f32[1]{0:T(128)S(6)}', space=smem, size = 0x200, scoped, tag = 'scoped memory for tpu_custom_call.1']
  %s0 = inlined_call_operand.hbm [shape: f32[8,16], index: 0, kind: input, shape index: {}]
  %s1 = inlined_call_operand.hbm [shape: f32[8,8], index: 1, kind: input, shape index: {}]
  %s2 = inlined_call_operand.hbm [shape: bf16[16,32], index: 2, kind: input, shape index: {}]
  %s3 = inlined_call_operand.hbm [shape: bf16[32,32], index: 3, kind: input, shape index: {}]
  %s4 = inlined_call_operand.vmem [shape: bf16[8,32], index: 4, kind: input, shape index: {}]
  %s5 = inlined_call_operand.vmem [shape: f32[3,32], index: 5, kind: input, shape index: {}]
  %s6 = inlined_call_operand.<no memory space> [shape: f32[1], index: 6, kind: input, shape index: {}]
  %s7 = inlined_call_operand.hbm [shape: f32[1,1,8], index: 7, kind: output, shape index: {}]
  %s8 = sld [smem:[#allocation0]]
  $region54: #{tpu_custom_call.1} parent=0
    _
  %s10 = ssub.s32 1, %s8
  %s11 = scalar_select 0, %s10, %s8
  %12 = sst [smem:[#allocation2]] %s6
  $region1: #{tpu_custom_call.1} parent=0
    #allocation3 [shape = 'u8[4096]{0}', space=vmem, size = 0x1000, scoped, tag = 'input window, operand 0, single buffered']
    #allocation4 [shape = 's32[1]{0}', space=sflag, size = 0x4, scoped, tag = 'scoped memory for tpu_custom_call.1']
    #allocation5 [shape = 's32[1]{0}', space=sflag, size = 0x4, scoped, tag = 'scoped memory for tpu_custom_call.1']
    #allocation6 [shape = 'u8[4096]{0}', space=vmem, size = 0x1000, scoped, tag = 'input window, operand 1, single buffered']
    #allocation7 [shape = 's32[1]{0}', space=sflag, size = 0x4, scoped, tag = 'scoped memory for tpu_custom_call.1']
    #allocation8 [shape = 'u8[4096]{0}', space=vmem, size = 0x1000, scoped, tag = 'input window, operand 2, single buffered']
    #allocation9 [shape = 'u8[8192]{0}', space=vmem, size = 0x2000, scoped, tag = 'input window, operand 3, single buffered']
    #allocation10 [shape = 's32[1]{0}', space=sflag, size = 0x4, scoped, tag = 'scoped memory for tpu_custom_call.1']
    #allocation11 [shape = 'u8[512]{0}', space=vmem, size = 0x400, scoped, tag = 'output window, operand 0, single buffered']
    %13 = vsyncpa [#allocation4], 0
    %14 = vsyncpa [#allocation7], 0
    %15 = vsyncpa [#allocation10], 0
    %16 = vsyncpa [#allocation5], 0
    // Predicated region
    $region2: #{tpu_custom_call.1} parent=1 // pred_check
      _
    $region3: #{tpu_custom_call.1} parent=1 // pred_check_branch
      %18 = sbr.rel (0) target = $region5
    $region4: #{tpu_custom_call.1} parent=1 // pred_region
      %s20 = ssub.s32 128, 128
      %21 = vsyncadd [#allocation4], %s20
      %s23 = sshll.u32 [#allocation3], 4
      %s24 = int_to_ptr.vmem [resolvable:$true] %s23
      %26 = dma.hbm_to_vmem [thread:$0]  %s0, 128, %s24, [#allocation4]
    $region5: #{tpu_custom_call.1} parent=1 // pred_fallthru
      _
    // Predicated region
    $region6: #{tpu_custom_call.1} parent=1 // pred_check
      _
    $region7: #{tpu_custom_call.1} parent=1 // pred_check_branch
      %28 = sbr.rel (0) target = $region9
    $region8: #{tpu_custom_call.1} parent=1 // pred_region
      %s30 = ssub.s32 128, 128
      %31 = vsyncadd [#allocation7], %s30
      %s33 = sshll.u32 [#allocation6], 4
      %s34 = int_to_ptr.vmem [resolvable:$true] %s33
      %36 = dma.hbm_to_vmem [thread:$0]  %s1, 128, %s34, [#allocation7]
    $region9: #{tpu_custom_call.1} parent=1 // pred_fallthru
      _
    // Predicated region
    $region10: #{tpu_custom_call.1} parent=1 // pred_check
      _
    $region11: #{tpu_custom_call.1} parent=1 // pred_check_branch
      %38 = sbr.rel (0) target = $region13
    $region12: #{tpu_custom_call.1} parent=1 // pred_region
      %s40 = ssub.s32 128, 128
      %41 = vsyncadd [#allocation7], %s40
      %s42 = sshll.u32 [#allocation8], 4
      %s43 = int_to_ptr.vmem [resolvable:$true] %s42
      %48 = dma.hbm_to_vmem [thread:$0]  %s2, 128, %s43, [#allocation7], 64, 64, 4
    $region13: #{tpu_custom_call.1} parent=1 // pred_fallthru
      _
    // Predicated region
    $region14: #{tpu_custom_call.1} parent=1 // pred_check
      _
    $region15: #{tpu_custom_call.1} parent=1 // pred_check_branch
      %50 = sbr.rel (0) target = $region17
    $region16: #{tpu_custom_call.1} parent=1 // pred_region
      %s52 = ssub.s32 256, 256
      %53 = vsyncadd [#allocation10], %s52
      %s54 = sshll.u32 [#allocation9], 4
      %s55 = int_to_ptr.vmem [resolvable:$true] %s54
      %60 = dma.hbm_to_vmem [thread:$0]  %s3, 256, %s55, [#allocation10], 64, 64, 4
    $region17: #{tpu_custom_call.1} parent=1 // pred_fallthru
      _
    // Predicated region
    $region18: #{tpu_custom_call.1} parent=1 // pred_check
      _
    $region19: #{tpu_custom_call.1} parent=1 // pred_check_branch
      %62 = sbr.rel (0) target = $region21
    $region20: #{tpu_custom_call.1} parent=1 // pred_region
      _
    $region21: #{tpu_custom_call.1} parent=1 // pred_fallthru
      _
    // Predicated region
    $region22: #{tpu_custom_call.1} parent=1 // pred_check
      _
    $region23: #{tpu_custom_call.1} parent=1 // pred_check_branch
      %64 = sbr.rel (0) target = $region25
    $region24: #{tpu_custom_call.1} parent=1 // pred_region
      _
    $region25: #{tpu_custom_call.1} parent=1 // pred_fallthru
      _
    // Predicated region
    $region26: #{tpu_custom_call.1} parent=1 // pred_check
      _
    $region27: #{tpu_custom_call.1} parent=1 // pred_check_branch
      %66 = sbr.rel (0) target = $region29
    $region28: #{tpu_custom_call.1} parent=1 // pred_region
      _
    $region29: #{tpu_custom_call.1} parent=1 // pred_fallthru
      _
    // Predicated region
    $region30: #{tpu_custom_call.1} parent=1 // pred_check
      _
    $region31: #{tpu_custom_call.1} parent=1 // pred_check_branch
      %68 = sbr.rel (0) target = $region33
    $region32: #{tpu_custom_call.1} parent=1 // pred_region
      %69 = dma.done [#allocation4], 128
    $region33: #{tpu_custom_call.1} parent=1 // pred_fallthru
      _
    // Predicated region
    $region34: #{tpu_custom_call.1} parent=1 // pred_check
      _
    $region35: #{tpu_custom_call.1} parent=1 // pred_check_branch
      %71 = sbr.rel (0) target = $region37
    $region36: #{tpu_custom_call.1} parent=1 // pred_region
      %72 = dma.done [#allocation7], 128
    $region37: #{tpu_custom_call.1} parent=1 // pred_fallthru
      _
    // Predicated region
    $region38: #{tpu_custom_call.1} parent=1 // pred_check
      _
    $region39: #{tpu_custom_call.1} parent=1 // pred_check_branch
      %74 = sbr.rel (0) target = $region41
    $region40: #{tpu_custom_call.1} parent=1 // pred_region
      %75 = dma.done [#allocation7], 128
    $region41: #{tpu_custom_call.1} parent=1 // pred_fallthru
      _
    // Predicated region
    $region42: #{tpu_custom_call.1} parent=1 // pred_check
      _
    $region43: #{tpu_custom_call.1} parent=1 // pred_check_branch
      %77 = sbr.rel (0) target = $region45
    $region44: #{tpu_custom_call.1} parent=1 // pred_region
      %78 = dma.done [#allocation10], 256
    $region45: #{tpu_custom_call.1} parent=1 // pred_fallthru
      _
    %v80 = vld [vmem:[#allocation8] sm:$0xf]
    %v81 = vld [vmem:[#allocation8 + $0x4] sm:$0xf]
    %v82 = vld [vmem:[#allocation9] sm:$0xf]
    %v83 = vld [vmem:[#allocation9 + $0x4] sm:$0xf]
    %v84 = vld [vmem:[#allocation9 + $0x8] sm:$0xf]
    %v85 = vld [vmem:[#allocation9 + $0xc] sm:$0xf]
    %v86 = vld [vmem:[%s4] sm:$0xf]
    %v87 = vld [vmem:[%s5] sm:$0x7]
    %v88 = vpack.c.bf16 %v87, %v87
    %s89 = sld [smem:[#allocation2]]
    %v90 = vld [vmem:[#allocation3] sm:$0xff]
    %v91 = vpack.c.bf16 %v90, %v90
    %v92 = vld [vmem:[#allocation6] sm:$0xff]
    %v93 = vpack.c.bf16 %v92, %v92
    %v94 = vlaneseq
    %v95 = vshrl.u32 %v94, 7
    %v96 = vsub.s32 0, %v95
    %v97 = vrot.slane %v87, %v96
    %v100 = vunpack.c.l.b16 %v80
    %v101 = vunpack.c.l.b16 %v81
    %v102 = vpack.c.b16 %v101, %v100
    %vm104 = vcmask 130048
    %v106 = vsel %vm104, %v91, 0
    %108 = vmatprep.subr.bf16.mxu0 0
    %109 = vmatpush1.bf16.msra.mxu0 0
    %110 = vmatprep.subr.bf16.mxu0 0
    %111 = vmatpush1.bf16.msra.mxu0 0
    %112 = vmatprep.subr.bf16.mxu0 0
    %113 = vmatpush1.bf16.msra.mxu0 0
    %114 = vmatprep.subr.bf16.mxu0 0
    %115 = vmatpush1.bf16.msra.mxu0 0
    %116 = vmatprep.subr.bf16.mxu0 0
    %117 = vmatpush1.bf16.msra.mxu0 0
    %118 = vmatprep.subr.bf16.mxu0 0
    %119 = vmatpush1.bf16.msra.mxu0 0
    %120 = vmatprep.subr.bf16.mxu0 0
    %121 = vmatpush1.bf16.msra.mxu0 0
    %122 = vmatprep.subr.bf16.mxu0 0
    %123 = vmatpush1.bf16.msra.mxu0 %v102
    %124 = vmatprep.subr.bf16.mxu0 0
    %125 = vmatpush2.bf16.msra.mxu0 0
    %126 = vmatprep.subr.bf16.mxu0 0
    %127 = vmatpush2.bf16.msra.mxu0 0
    %128 = vmatprep.subr.bf16.mxu0 0
    %129 = vmatpush2.bf16.msra.mxu0 0
    %130 = vmatprep.subr.bf16.mxu0 0
    %131 = vmatpush2.bf16.msra.mxu0 0
    %132 = vmatprep.subr.bf16.mxu0 0
    %133 = vmatpush2.bf16.msra.mxu0 0
    %134 = vmatprep.subr.bf16.mxu0 0
    %135 = vmatpush2.bf16.msra.mxu0 0
    %136 = vmatprep.subr.bf16.mxu0 0
    %137 = vmatpush2.bf16.msra.mxu0 0
    %138 = vmatprep.subr.bf16.mxu0 0
    %139 = vmatpush2.bf16.msra.mxu0 0
    %140 = vmatprep.mubr.bf16.mxu0 0
    %141 = vmatmul.mubr.bf16.gmra.mxu0 %v106
    %v142 = vpop.f32.mrf.mxu0
    %v143 = vadd.f32 %v97, %v142
    %v144 = vpop.f32.mrf.mxu0
    %v145 = vpop.f32.mrf.mxu0
    %v146 = vpop.f32.mrf.mxu0
    %147 = vdwg.mxu0
    %v148 = vmax.f32 %v143, 0.0
    %v149 = vpack.c.bf16 %v148, %v148
    %vm150 = vcmask 64512
    %v152 = vsel %vm150, %v93, 0
    %vm154 = vcmask 1043456
    %v156 = vsel %vm154, %v86, 0
    %158 = vmatprep.subr.bf16.mxu0 0
    %159 = vmatpush1.bf16.msra.mxu0 0
    %160 = vmatprep.subr.bf16.mxu0 0
    %161 = vmatpush1.bf16.msra.mxu0 0
    %162 = vmatprep.subr.bf16.mxu0 0
    %163 = vmatpush1.bf16.msra.mxu0 0
    %164 = vmatprep.subr.bf16.mxu0 0
    %165 = vmatpush1.bf16.msra.mxu0 0
    %166 = vmatprep.subr.bf16.mxu0 0
    %167 = vmatpush1.bf16.msra.mxu0 0
    %168 = vmatprep.subr.bf16.mxu0 0
    %169 = vmatpush1.bf16.msra.mxu0 0
    %170 = vmatprep.subr.bf16.mxu0 0
    %171 = vmatpush1.bf16.msra.mxu0 0
    %172 = vmatprep.subr.bf16.mxu0 0
    %173 = vmatpush1.bf16.msra.mxu0 %v156
    %174 = vmatprep.subr.bf16.mxu0 0
    %175 = vmatpush2.bf16.msra.mxu0 0
    %176 = vmatprep.subr.bf16.mxu0 0
    %177 = vmatpush2.bf16.msra.mxu0 0
    %178 = vmatprep.subr.bf16.mxu0 0
    %179 = vmatpush2.bf16.msra.mxu0 0
    %180 = vmatprep.subr.bf16.mxu0 0
    %181 = vmatpush2.bf16.msra.mxu0 0
    %182 = vmatprep.subr.bf16.mxu0 0
    %183 = vmatpush2.bf16.msra.mxu0 0
    %184 = vmatprep.subr.bf16.mxu0 0
    %185 = vmatpush2.bf16.msra.mxu0 0
    %186 = vmatprep.subr.bf16.mxu0 0
    %187 = vmatpush2.bf16.msra.mxu0 0
    %188 = vmatprep.subr.bf16.mxu0 0
    %189 = vmatpush2.bf16.msra.mxu0 0
    %190 = vmatprep.mubr.bf16.mxu0 0
    %191 = vmatmul.mubr.bf16.gmra.mxu0 %v152
    %v192 = vpop.f32.mrf.mxu0
    %v193 = vadd.f32 0.0, %v192
    %v194 = vpop.f32.mrf.mxu0
    %v195 = vpop.f32.mrf.mxu0
    %v196 = vpop.f32.mrf.mxu0
    %197 = vdwg.mxu0
    %v202 = vunpack.c.l.b16 %v82
    %v203 = vunpack.c.l.b16 %v83
    %v204 = vunpack.c.l.b16 %v84
    %v205 = vunpack.c.l.b16 %v85
    %v206 = vpack.c.b16 %v203, %v202
    %v207 = vpack.c.b16 %v205, %v204
    %vm210 = vcmask 261120
    %v212 = vsel %vm210, %v149, 0
    %214 = vmatprep.subr.bf16.mxu0 0
    %215 = vmatpush1.bf16.msra.mxu0 0
    %216 = vmatprep.subr.bf16.mxu0 0
    %217 = vmatpush1.bf16.msra.mxu0 0
    %218 = vmatprep.subr.bf16.mxu0 0
    %219 = vmatpush1.bf16.msra.mxu0 0
    %220 = vmatprep.subr.bf16.mxu0 0
    %221 = vmatpush1.bf16.msra.mxu0 0
    %222 = vmatprep.subr.bf16.mxu0 0
    %223 = vmatpush1.bf16.msra.mxu0 0
    %224 = vmatprep.subr.bf16.mxu0 0
    %225 = vmatpush1.bf16.msra.mxu0 0
    %226 = vmatprep.subr.bf16.mxu0 0
    %227 = vmatpush1.bf16.msra.mxu0 %v207
    %228 = vmatprep.subr.bf16.mxu0 0
    %229 = vmatpush1.bf16.msra.mxu0 %v206
    %230 = vmatprep.subr.bf16.mxu0 0
    %231 = vmatpush2.bf16.msra.mxu0 0
    %232 = vmatprep.subr.bf16.mxu0 0
    %233 = vmatpush2.bf16.msra.mxu0 0
    %234 = vmatprep.subr.bf16.mxu0 0
    %235 = vmatpush2.bf16.msra.mxu0 0
    %236 = vmatprep.subr.bf16.mxu0 0
    %237 = vmatpush2.bf16.msra.mxu0 0
    %238 = vmatprep.subr.bf16.mxu0 0
    %239 = vmatpush2.bf16.msra.mxu0 0
    %240 = vmatprep.subr.bf16.mxu0 0
    %241 = vmatpush2.bf16.msra.mxu0 0
    %242 = vmatprep.subr.bf16.mxu0 0
    %243 = vmatpush2.bf16.msra.mxu0 0
    %244 = vmatprep.subr.bf16.mxu0 0
    %245 = vmatpush2.bf16.msra.mxu0 0
    %246 = vmatprep.mubr.bf16.mxu0 0
    %247 = vmatmul.mubr.bf16.gmra.mxu0 %v212
    %v248 = vpop.f32.mrf.mxu0
    %v249 = vadd.f32 %v193, %v248
    %v250 = vpop.f32.mrf.mxu0
    %v251 = vpop.f32.mrf.mxu0
    %v252 = vpop.f32.mrf.mxu0
    %253 = vdwg.mxu0
    %v254 = vlaneseq
    %v255 = vshrl.u32 %v254, 7
    %v256 = vsub.s32 1, %v255
    %v257 = vrot.slane %v87, %v256
    %v258 = vadd.f32 %v249, %v257
    %v259 = vmax.f32 %v258, 0.0
    %v260 = vpack.c.bf16 %v259, %v259
    %v261 = vstv %s89
    %v263 = vrot.slane %v88, 1
    %v265 = vsel %vm210, %v263, 0
    %v268 = vsel %vm210, %v260, 0
    %270 = vmatprep.subr.bf16.mxu0 0
    %271 = vmatpush1.bf16.xpose.msra.mxu0 0
    %272 = vmatprep.subr.bf16.mxu0 0
    %273 = vmatpush1.bf16.xpose.msra.mxu0 0
    %274 = vmatprep.subr.bf16.mxu0 0
    %275 = vmatpush1.bf16.xpose.msra.mxu0 0
    %276 = vmatprep.subr.bf16.mxu0 0
    %277 = vmatpush1.bf16.xpose.msra.mxu0 0
    %278 = vmatprep.subr.bf16.mxu0 0
    %279 = vmatpush1.bf16.xpose.msra.mxu0 0
    %280 = vmatprep.subr.bf16.mxu0 0
    %281 = vmatpush1.bf16.xpose.msra.mxu0 0
    %282 = vmatprep.subr.bf16.mxu0 0
    %283 = vmatpush1.bf16.xpose.msra.mxu0 0
    %284 = vmatprep.subr.bf16.mxu0 0
    %285 = vmatpush1.bf16.xpose.msra.mxu0 %v268
    %286 = vmatprep.subr.bf16.mxu0 0
    %287 = vmatpush2.bf16.xpose.msra.mxu0 0
    %288 = vmatprep.subr.bf16.mxu0 0
    %289 = vmatpush2.bf16.xpose.msra.mxu0 0
    %290 = vmatprep.subr.bf16.mxu0 0
    %291 = vmatpush2.bf16.xpose.msra.mxu0 0
    %292 = vmatprep.subr.bf16.mxu0 0
    %293 = vmatpush2.bf16.xpose.msra.mxu0 0
    %294 = vmatprep.subr.bf16.mxu0 0
    %295 = vmatpush2.bf16.xpose.msra.mxu0 0
    %296 = vmatprep.subr.bf16.mxu0 0
    %297 = vmatpush2.bf16.xpose.msra.mxu0 0
    %298 = vmatprep.subr.bf16.mxu0 0
    %299 = vmatpush2.bf16.xpose.msra.mxu0 0
    %300 = vmatprep.subr.bf16.mxu0 0
    %301 = vmatpush2.bf16.xpose.msra.mxu0 0
    %302 = vmatprep.mubr.bf16.mxu0 0
    %303 = vmatmul.mubr.bf16.gmra.mxu0 %v265
    %v304 = vpop.f32.mrf.mxu0
    %v305 = vadd.f32 %v261, %v304
    %v306 = vpop.f32.mrf.mxu0
    %v307 = vpop.f32.mrf.mxu0
    %v308 = vpop.f32.mrf.mxu0
    %309 = vdwg.mxu0
    %vm310 = vcmask 57344
    %311 = vst.msk [vmem:[#allocation11] sm:$0x1] %vm310, %v305
    // Predicated region
    $region46: #{tpu_custom_call.1} parent=1 // pred_check
      _
    $region47: #{tpu_custom_call.1} parent=1 // pred_check_branch
      %313 = sbr.rel (0) target = $region49
    $region48: #{tpu_custom_call.1} parent=1 // pred_region
      %s315 = ssub.s32 16, 16
      %316 = vsyncadd [#allocation5], %s315
      %s318 = sshll.u32 [#allocation11], 4
      %s319 = int_to_ptr.vmem [resolvable:$true] %s318
      %321 = dma.vmem_to_hbm [thread:$0]  %s319, 16, %s7, [#allocation5]
    $region49: #{tpu_custom_call.1} parent=1 // pred_fallthru
      _
    // Predicated region
    $region50: #{tpu_custom_call.1} parent=1 // pred_check
      _
    $region51: #{tpu_custom_call.1} parent=1 // pred_check_branch
      %323 = sbr.rel (0) target = $region53
    $region52: #{tpu_custom_call.1} parent=1 // pred_region
      %324 = dma.done [#allocation5], 16
    $region53: #{tpu_custom_call.1} parent=1 // pred_fallthru
      _
    %325 = vsyncpa [#allocation4], 1
    %326 = vsyncpa [#allocation7], 1
    %327 = vsyncpa [#allocation10], 1
    %328 = vsyncpa [#allocation5], 1

</llo_original>
